<compile_context>
chip_gen: v5e
topology: v5e:2x2
jax: 0.10.0
libtpu: 0.0.40
codegen_flags: <defaults>
</compile_context>

<pallas_src>
import functools

import jax
import jax.numpy as jnp
from jax.experimental import pallas as pl
from jax.experimental.pallas import tpu as pltpu

LANE = 128  # feature dims padded to a multiple of the 128-wide lane axis


def _round_up(x, m):
    return m * pl.cdiv(x, m)


# ---------------------------------------------------------------------------
# Fused kernel: all MLP layers on one (row_tile, f_in_p) row tile of x.
# Weight/bias refs are grid-invariant -> resident in VMEM across row tiles.
# ---------------------------------------------------------------------------
def _mlp_kernel(x_ref, *refs, num_layers):
    w_refs = refs[:num_layers]
    b_refs = refs[num_layers:2 * num_layers]
    o_ref = refs[2 * num_layers]

    h = x_ref[...]                                        # bf16 (tm, f_in_p)
    for l in range(num_layers):                           # static unroll (L small)
        acc = jnp.dot(h, w_refs[l][...],                  # MXU, f32 accumulate
                      preferred_element_type=jnp.float32)
        acc = acc + b_refs[l][...]                        # (1, f_out_p) broadcast
        if l < num_layers - 1:
            acc = jnp.maximum(acc, 0.0)                   # ReLU; dropout(p=0) = id
            h = acc.astype(jnp.bfloat16)                  # back to MXU dtype
        else:
            o_ref[...] = acc.astype(o_ref.dtype)          # lane-dense store


# ---------------------------------------------------------------------------
# One-time parameter preparation (hoisted out of the per-call path).
# ---------------------------------------------------------------------------
def prepare_params(weights, biases):
    """Pad each layer to lane multiples and cast for the MXU.  Call ONCE."""
    w_p, b_p, dims = [], [], []
    for w, b in zip(weights, biases):
        fi, fo = w.shape
        fip, fop = _round_up(fi, LANE), _round_up(fo, LANE)
        w_p.append(jnp.pad(w, ((0, fip - fi), (0, fop - fo))).astype(jnp.bfloat16))
        b_p.append(jnp.pad(b, (0, fop - fo))[None, :].astype(jnp.float32))
        dims.append((int(fi), int(fo)))
    return tuple(w_p), tuple(b_p), tuple(dims)


def _pick_row_tile(n):
    # Largest tile that still leaves >= 2 grid steps (v7x megacore sharding);
    # 256-multiples fill the 2x256^2 MXU on v6e/v7x once N is large enough.
    for t in (1024, 512, 256, 128):
        if n >= 2 * t:
            return t
    return 128


@functools.partial(jax.jit, static_argnames=("dims", "dropout", "out_dtype"))
def mlp_forward(x, w_padded, b_padded, dims, dropout=0.0, out_dtype=jnp.float32):
    """x: (N, in_ch) f32; w_padded/b_padded/dims come from prepare_params()."""
    # TODO(synk): dropout p > 0 in training mode would need pltpu.prng_seed /
    # prng_random_bits masking inside the kernel; the forward default p=0.0 is
    # an identity, which we assert here instead of silently ignoring.
    assert dropout == 0.0, "only inference / p=0.0 dropout is implemented"

    n, in_ch = x.shape
    num_layers = len(w_padded)
    out_ch = dims[-1][1]
    in_p = w_padded[0].shape[0]        # lane-padded input width
    out_p = w_padded[-1].shape[1]      # lane-padded output width

    row_tile = _pick_row_tile(n)
    n_pad = _round_up(n, row_tile)

    x_p = x.astype(jnp.bfloat16)
    if n_pad != n or in_p != in_ch:    # skip the pad entirely when aligned
        x_p = jnp.pad(x_p, ((0, n_pad - n), (0, in_p - in_ch)))

    # Cost from the true (unpadded) layer dims so XLA's scheduler isn't misled.
    flops = 2 * n * sum(fi * fo for fi, fo in dims)
    bytes_accessed = (n * in_ch * 2
                      + sum(w.size * 2 for w in w_padded)
                      + sum(b.size * 4 for b in b_padded)
                      + n * out_ch * jnp.dtype(out_dtype).itemsize)
    cost = pl.CostEstimate(flops=flops, transcendentals=0,
                           bytes_accessed=bytes_accessed)

    # Grid-invariant weights/biases: single-buffer once the slab is big enough
    # that default double-buffering threatens VMEM (v7x: 64 MiB phys / 32 scoped).
    w_bytes = sum(w.size * w.dtype.itemsize for w in w_padded)
    single_buffer = w_bytes > (4 << 20)

    def resident_spec(shape):
        idx = lambda i: (0,) * len(shape)
        if single_buffer:
            return pl.BlockSpec(shape, idx, pipeline_mode=pl.Buffered(1))
        return pl.BlockSpec(shape, idx)

    in_specs = [pl.BlockSpec((row_tile, in_p), lambda i: (i, 0))]       # x rows
    in_specs += [resident_spec(w.shape) for w in w_padded]              # weights
    in_specs += [resident_spec(b.shape) for b in b_padded]              # biases

    out = pl.pallas_call(
        functools.partial(_mlp_kernel, num_layers=num_layers),
        out_shape=jax.ShapeDtypeStruct((n_pad, out_p), out_dtype),
        grid=(n_pad // row_tile,),
        in_specs=in_specs,
        out_specs=pl.BlockSpec((row_tile, out_p), lambda i: (i, 0)),
        compiler_params=pltpu.CompilerParams(
            dimension_semantics=("parallel",)),   # shard row tiles across TCs
        cost_estimate=cost,
    )(x_p, *w_padded, *b_padded)

    return out[:n, :out_ch]


# ---------------------------------------------------------------------------
# Deterministic parameter init (matches the Linear stack layout of the module)
# ---------------------------------------------------------------------------
def init_params(key, in_channels, hidden_channels, out_channels, num_layers):
    if num_layers == 1:
        dims = [in_channels, out_channels]
    else:
        dims = [in_channels] + [hidden_channels] * (num_layers - 1) + [out_channels]
    weights, biases = [], []
    for i in range(num_layers):
        fan_in, fan_out = dims[i], dims[i + 1]
        key, kw, kb = jax.random.split(key, 3)
        limit = 1.0 / jnp.sqrt(jnp.float32(fan_in))
        w = jax.random.uniform(kw, (fan_in, fan_out), jnp.float32, -limit, limit)
        b = jax.random.uniform(kb, (fan_out,), jnp.float32, -limit, limit)
        weights.append(w)
        biases.append(b)
    return weights, biases


if __name__ == "__main__":
    # Small shapes consistent with the module.
    N = 256              # batch rows
    IN_CH = 16
    HIDDEN = 32
    OUT_CH = 8
    NUM_LAYERS = 3
    DROPOUT = 0.0        # module default; identity in forward

    key = jax.random.PRNGKey(0)
    key, kx = jax.random.split(key)
    x = jax.random.normal(kx, (N, IN_CH), jnp.float32)
    weights, biases = init_params(key, IN_CH, HIDDEN, OUT_CH, NUM_LAYERS)

    # One-time parameter prep (hoisted out of the per-call path).
    w_p, b_p, dims = prepare_params(weights, biases)

    out = mlp_forward(x, w_p, b_p, dims=dims, dropout=DROPOUT)
    jax.block_until_ready(out)
    assert out.shape == (N, OUT_CH)

    # bf16-consistent pure-JAX reference (bf16 operands, f32 accumulation),
    # matching the kernel's numerics.
    h = x.astype(jnp.bfloat16)
    for i in range(NUM_LAYERS):
        acc = jnp.dot(h.astype(jnp.float32),
                      weights[i].astype(jnp.bfloat16).astype(jnp.float32),
                      precision=jax.lax.Precision.HIGHEST)
        acc = acc + biases[i]
        if i < NUM_LAYERS - 1:
            acc = jnp.maximum(acc, 0.0)
            h = acc.astype(jnp.bfloat16)
    ref = acc

    assert jnp.allclose(out, ref, atol=1e-3, rtol=1e-3), (
        float(jnp.max(jnp.abs(out - ref))))

    print("KERNEL_OK")
</pallas_src>

<mosaic_0001>
module attributes {stable_mosaic.version = 11 : i64} {
  func.func @_mlp_kernel(%arg0: i32, %arg1: memref<128x128xbf16, #tpu.memory_space<vmem>>, %arg2: memref<128x128xbf16, #tpu.memory_space<vmem>>, %arg3: memref<128x128xbf16, #tpu.memory_space<vmem>>, %arg4: memref<128x128xbf16, #tpu.memory_space<vmem>>, %arg5: memref<1x128xf32, #tpu.memory_space<vmem>>, %arg6: memref<1x128xf32, #tpu.memory_space<vmem>>, %arg7: memref<1x128xf32, #tpu.memory_space<vmem>>, %arg8: memref<128x128xf32, #tpu.memory_space<vmem>>) attributes {dimension_semantics = [#tpu.dimension_semantics<parallel>], iteration_bounds = array<i64: 2>, scalar_prefetch = 0 : i64, scratch_operands = 0 : i64, tpu.core_type = #tpu.core_type<tc>, window_params = [{transform_indices = @transform_0, window_bounds = array<i64: 128, 128>}, {pipeline_mode = #tpu.pipeline_mode<synchronous>, transform_indices = @transform_1, window_bounds = array<i64: 128, 128>}, {pipeline_mode = #tpu.pipeline_mode<synchronous>, transform_indices = @transform_2, window_bounds = array<i64: 128, 128>}, {pipeline_mode = #tpu.pipeline_mode<synchronous>, transform_indices = @transform_3, window_bounds = array<i64: 128, 128>}, {pipeline_mode = #tpu.pipeline_mode<synchronous>, transform_indices = @transform_4, window_bounds = array<i64: 1, 128>}, {pipeline_mode = #tpu.pipeline_mode<synchronous>, transform_indices = @transform_5, window_bounds = array<i64: 1, 128>}, {pipeline_mode = #tpu.pipeline_mode<synchronous>, transform_indices = @transform_6, window_bounds = array<i64: 1, 128>}, {transform_indices = @transform_7, window_bounds = array<i64: 128, 128>}]} {
    %c0 = arith.constant 0 : index
    %c0_0 = arith.constant 0 : index
    %0 = vector.load %arg1[%c0, %c0_0] : memref<128x128xbf16, #tpu.memory_space<vmem>>, vector<128x128xbf16>
    %c0_1 = arith.constant 0 : index
    %c0_2 = arith.constant 0 : index
    %1 = vector.load %arg2[%c0_1, %c0_2] : memref<128x128xbf16, #tpu.memory_space<vmem>>, vector<128x128xbf16>
    %cst = arith.constant dense<0.000000e+00> : vector<128x128xf32>
    %2 = tpu.matmul %0, %1, %cst {dimension_numbers = #tpu.dot_dimension_numbers<[1], [0], [0], [1], [0, 0, 1, 1], [], []>} : vector<128x128xbf16>, vector<128x128xbf16>, vector<128x128xf32> -> vector<128x128xf32>
    %c0_3 = arith.constant 0 : index
    %c0_4 = arith.constant 0 : index
    %3 = vector.load %arg5[%c0_3, %c0_4] : memref<1x128xf32, #tpu.memory_space<vmem>>, vector<1x128xf32>
    %4 = vector.broadcast %3 : vector<1x128xf32> to vector<128x128xf32>
    %5 = arith.addf %2, %4 : vector<128x128xf32>
    %cst_5 = arith.constant 0.000000e+00 : f32
    %6 = vector.broadcast %cst_5 : f32 to vector<128x128xf32>
    %7 = arith.maximumf %5, %6 : vector<128x128xf32>
    %8 = arith.truncf %7 : vector<128x128xf32> to vector<128x128xbf16>
    %c0_6 = arith.constant 0 : index
    %c0_7 = arith.constant 0 : index
    %9 = vector.load %arg3[%c0_6, %c0_7] : memref<128x128xbf16, #tpu.memory_space<vmem>>, vector<128x128xbf16>
    %cst_8 = arith.constant dense<0.000000e+00> : vector<128x128xf32>
    %10 = tpu.matmul %8, %9, %cst_8 {dimension_numbers = #tpu.dot_dimension_numbers<[1], [0], [0], [1], [0, 0, 1, 1], [], []>} : vector<128x128xbf16>, vector<128x128xbf16>, vector<128x128xf32> -> vector<128x128xf32>
    %c0_9 = arith.constant 0 : index
    %c0_10 = arith.constant 0 : index
    %11 = vector.load %arg6[%c0_9, %c0_10] : memref<1x128xf32, #tpu.memory_space<vmem>>, vector<1x128xf32>
    %12 = vector.broadcast %11 : vector<1x128xf32> to vector<128x128xf32>
    %13 = arith.addf %10, %12 : vector<128x128xf32>
    %cst_11 = arith.constant 0.000000e+00 : f32
    %14 = vector.broadcast %cst_11 : f32 to vector<128x128xf32>
    %15 = arith.maximumf %13, %14 : vector<128x128xf32>
    %16 = arith.truncf %15 : vector<128x128xf32> to vector<128x128xbf16>
    %c0_12 = arith.constant 0 : index
    %c0_13 = arith.constant 0 : index
    %17 = vector.load %arg4[%c0_12, %c0_13] : memref<128x128xbf16, #tpu.memory_space<vmem>>, vector<128x128xbf16>
    %cst_14 = arith.constant dense<0.000000e+00> : vector<128x128xf32>
    %18 = tpu.matmul %16, %17, %cst_14 {dimension_numbers = #tpu.dot_dimension_numbers<[1], [0], [0], [1], [0, 0, 1, 1], [], []>} : vector<128x128xbf16>, vector<128x128xbf16>, vector<128x128xf32> -> vector<128x128xf32>
    %c0_15 = arith.constant 0 : index
    %c0_16 = arith.constant 0 : index
    %19 = vector.load %arg7[%c0_15, %c0_16] : memref<1x128xf32, #tpu.memory_space<vmem>>, vector<1x128xf32>
    %20 = vector.broadcast %19 : vector<1x128xf32> to vector<128x128xf32>
    %21 = arith.addf %18, %20 : vector<128x128xf32>
    %c0_17 = arith.constant 0 : index
    %c0_18 = arith.constant 0 : index
    %22 = vector.load %arg8[%c0_17, %c0_18] : memref<128x128xf32, #tpu.memory_space<vmem>>, vector<128x128xf32>
    tpu.vector_store %arg8[%c0_17, %c0_18], %21 {strides = array<i32>} : memref<128x128xf32, #tpu.memory_space<vmem>>, vector<128x128xf32>,
    return
  }
  func.func @transform_0(%arg0: i32) -> (i32, i32) {
    %c0_i32 = arith.constant 0 : i32
    %c0_i32_0 = arith.constant 0 : i32
    return %arg0, %c0_i32 : i32, i32
  }
  func.func @transform_1(%arg0: i32) -> (i32, i32) {
    %c0_i32 = arith.constant 0 : i32
    %c0_i32_0 = arith.constant 0 : i32
    %c0_i32_1 = arith.constant 0 : i32
    return %c0_i32, %c0_i32_0 : i32, i32
  }
  func.func @transform_2(%arg0: i32) -> (i32, i32) {
    %c0_i32 = arith.constant 0 : i32
    %c0_i32_0 = arith.constant 0 : i32
    %c0_i32_1 = arith.constant 0 : i32
    return %c0_i32, %c0_i32_0 : i32, i32
  }
  func.func @transform_3(%arg0: i32) -> (i32, i32) {
    %c0_i32 = arith.constant 0 : i32
    %c0_i32_0 = arith.constant 0 : i32
    %c0_i32_1 = arith.constant 0 : i32
    return %c0_i32, %c0_i32_0 : i32, i32
  }
  func.func @transform_4(%arg0: i32) -> (i32, i32) {
    %c0_i32 = arith.constant 0 : i32
    %c0_i32_0 = arith.constant 0 : i32
    %c0_i32_1 = arith.constant 0 : i32
    return %c0_i32, %c0_i32_0 : i32, i32
  }
  func.func @transform_5(%arg0: i32) -> (i32, i32) {
    %c0_i32 = arith.constant 0 : i32
    %c0_i32_0 = arith.constant 0 : i32
    %c0_i32_1 = arith.constant 0 : i32
    return %c0_i32, %c0_i32_0 : i32, i32
  }
  func.func @transform_6(%arg0: i32) -> (i32, i32) {
    %c0_i32 = arith.constant 0 : i32
    %c0_i32_0 = arith.constant 0 : i32
    %c0_i32_1 = arith.constant 0 : i32
    return %c0_i32, %c0_i32_0 : i32, i32
  }
  func.func @transform_7(%arg0: i32) -> (i32, i32) {
    %c0_i32 = arith.constant 0 : i32
    %c0_i32_0 = arith.constant 0 : i32
    return %arg0, %c0_i32 : i32, i32
  }
}

</mosaic_0001>

<llo_original>
// kernel: mlp_forward.1
$region0: #{mlp_forward.1}
  #allocation0 [shape = 'u32[]', space=smem, size = 0x4, offset = 0x4, fixed_abs, tag = 'smem constant byte address 0x4 - core index']
  #allocation1 [shape = 'u32[72,128]{1,0:T(1,128)}', space=vmem, size = 0x9000, scoped, tag = 'internal scratch']
  %s0 = inlined_call_operand.vmem [shape: bf16[256,128], index: 0, kind: input, shape index: {}]
  %s1 = inlined_call_operand.vmem [shape: bf16[128,128], index: 1, kind: input, shape index: {}]
  %s2 = inlined_call_operand.vmem [shape: bf16[128,128], index: 2, kind: input, shape index: {}]
  %s3 = inlined_call_operand.vmem [shape: bf16[128,128], index: 3, kind: input, shape index: {}]
  %s4 = inlined_call_operand.vmem [shape: f32[1,128], index: 4, kind: input, shape index: {}]
  %s5 = inlined_call_operand.vmem [shape: f32[1,128], index: 5, kind: input, shape index: {}]
  %s6 = inlined_call_operand.vmem [shape: f32[1,128], index: 6, kind: input, shape index: {}]
  %s7 = inlined_call_operand.vmem [shape: f32[256,128], index: 7, kind: output, shape index: {}]
  %s8 = sld [smem:[#allocation0]]
  $region61: #{mlp_forward.1} parent=0
    _
  %s10 = ssub.s32 1, %s8
  %s11 = scalar_select 0, %s10, %s8
  loop: start=0, step=1, limit=4
  $region2: #{mlp_forward.1} parent=0 // loop_pre_header
    _
  $region3: #{mlp_forward.1} parent=0 // loop_header
    %s13 = sphi 0, %s17
    %p14 = scmp.ge.s32.totalorder %s13, 4
    %s23 = sphi 0, %s25
    %s26 = sphi 0, %s23
    %s27 = sphi 0, %s26
    %s43 = sphi 0, %s27
    %s47 = sphi 0, %s47
    %s49 = sphi 0, %s47
    %s50 = sphi 0, %s49
    %s64 = sphi 0, %s50
    %s68 = sphi 0, %s68
    %s70 = sphi 0, %s68
    %s71 = sphi 0, %s70
    %s85 = sphi 0, %s71
    %s89 = sphi 0, %s89
    %s91 = sphi 0, %s89
    %s92 = sphi 0, %s91
    %s106 = sphi 0, %s92
    %s110 = sphi 0, %s110
    %s112 = sphi 0, %s110
    %s113 = sphi 0, %s112
    %s127 = sphi 0, %s113
    %s131 = sphi 0, %s131
    %s133 = sphi 0, %s131
    %s134 = sphi 0, %s133
    %s148 = sphi 0, %s134
    %s152 = sphi 0, %s152
    %s154 = sphi 0, %s152
    %s155 = sphi 0, %s154
    %s169 = sphi 0, %s155
    %s175 = sphi 0, %s177
    %s178 = sphi 0, %s175
    %s179 = sphi 0, %s178
    %s195 = sphi 0, %s179
  $region4: #{mlp_forward.1} parent=0 // loop_header_branch
    %16 = sbr.rel (%p14) target = $region8
  $region5: #{mlp_forward.1} parent=0 // loop_body
    %s18 = ssub.s32 %s13, 1
    %s19 = ssub.s32 %s13, 2
    %s20 = sadd.s32 %s13, 1
    %s21 = ssub.s32 %s13, %s20
    %p22 = scmp.eq.s32.totalorder %s21, 0
    %s24 = sadd.s32 %s23, 1
    %s25 = scalar_select %p22, %s23, %s24
    %p28 = pneg %p22
    %p29 = scmp.eq.s32.totalorder %s13, 1
    %p30 = por %p28, %p29
    %p31 = scmp.ne.s32.totalorder %s23, %s26
    %p32 = scmp.eq.s32.totalorder %s13, 0
    %p33 = por %p31, %p32
    %p34 = scmp.ne.s32.totalorder %s23, %s26
    %p35 = scmp.eq.s32.totalorder %s18, 1
    %p36 = por %p34, %p35
    %p37 = scmp.ne.s32.totalorder %s26, %s27
    %p38 = scmp.eq.s32.totalorder %s18, 0
    %p39 = por %p37, %p38
    %p40 = scmp.ne.s32.totalorder %s26, %s27
    %p41 = scmp.eq.s32.totalorder %s19, 1
    %p42 = por %p40, %p41
    %p44 = scmp.ne.s32.totalorder %s27, %s43
    %p45 = scmp.eq.s32.totalorder %s19, 0
    %p46 = por %p44, %p45
    %s48 = sadd.s32 %s47, 1
    %p51 = scmp.eq.s32.totalorder %s13, 1
    %p52 = scmp.ne.s32.totalorder %s47, %s49
    %p53 = scmp.eq.s32.totalorder %s13, 0
    %p54 = por %p52, %p53
    %p55 = scmp.ne.s32.totalorder %s47, %s49
    %p56 = scmp.eq.s32.totalorder %s18, 1
    %p57 = por %p55, %p56
    %p58 = scmp.ne.s32.totalorder %s49, %s50
    %p59 = scmp.eq.s32.totalorder %s18, 0
    %p60 = por %p58, %p59
    %p61 = scmp.ne.s32.totalorder %s49, %s50
    %p62 = scmp.eq.s32.totalorder %s19, 1
    %p63 = por %p61, %p62
    %p65 = scmp.ne.s32.totalorder %s50, %s64
    %p66 = scmp.eq.s32.totalorder %s19, 0
    %p67 = por %p65, %p66
    %s69 = sadd.s32 %s68, 1
    %p72 = scmp.eq.s32.totalorder %s13, 1
    %p73 = scmp.ne.s32.totalorder %s68, %s70
    %p74 = scmp.eq.s32.totalorder %s13, 0
    %p75 = por %p73, %p74
    %p76 = scmp.ne.s32.totalorder %s68, %s70
    %p77 = scmp.eq.s32.totalorder %s18, 1
    %p78 = por %p76, %p77
    %p79 = scmp.ne.s32.totalorder %s70, %s71
    %p80 = scmp.eq.s32.totalorder %s18, 0
    %p81 = por %p79, %p80
    %p82 = scmp.ne.s32.totalorder %s70, %s71
    %p83 = scmp.eq.s32.totalorder %s19, 1
    %p84 = por %p82, %p83
    %p86 = scmp.ne.s32.totalorder %s71, %s85
    %p87 = scmp.eq.s32.totalorder %s19, 0
    %p88 = por %p86, %p87
    %s90 = sadd.s32 %s89, 1
    %p93 = scmp.eq.s32.totalorder %s13, 1
    %p94 = scmp.ne.s32.totalorder %s89, %s91
    %p95 = scmp.eq.s32.totalorder %s13, 0
    %p96 = por %p94, %p95
    %p97 = scmp.ne.s32.totalorder %s89, %s91
    %p98 = scmp.eq.s32.totalorder %s18, 1
    %p99 = por %p97, %p98
    %p100 = scmp.ne.s32.totalorder %s91, %s92
    %p101 = scmp.eq.s32.totalorder %s18, 0
    %p102 = por %p100, %p101
    %p103 = scmp.ne.s32.totalorder %s91, %s92
    %p104 = scmp.eq.s32.totalorder %s19, 1
    %p105 = por %p103, %p104
    %p107 = scmp.ne.s32.totalorder %s92, %s106
    %p108 = scmp.eq.s32.totalorder %s19, 0
    %p109 = por %p107, %p108
    %s111 = sadd.s32 %s110, 1
    %p114 = scmp.eq.s32.totalorder %s13, 1
    %p115 = scmp.ne.s32.totalorder %s110, %s112
    %p116 = scmp.eq.s32.totalorder %s13, 0
    %p117 = por %p115, %p116
    %p118 = scmp.ne.s32.totalorder %s110, %s112
    %p119 = scmp.eq.s32.totalorder %s18, 1
    %p120 = por %p118, %p119
    %p121 = scmp.ne.s32.totalorder %s112, %s113
    %p122 = scmp.eq.s32.totalorder %s18, 0
    %p123 = por %p121, %p122
    %p124 = scmp.ne.s32.totalorder %s112, %s113
    %p125 = scmp.eq.s32.totalorder %s19, 1
    %p126 = por %p124, %p125
    %p128 = scmp.ne.s32.totalorder %s113, %s127
    %p129 = scmp.eq.s32.totalorder %s19, 0
    %p130 = por %p128, %p129
    %s132 = sadd.s32 %s131, 1
    %p135 = scmp.eq.s32.totalorder %s13, 1
    %p136 = scmp.ne.s32.totalorder %s131, %s133
    %p137 = scmp.eq.s32.totalorder %s13, 0
    %p138 = por %p136, %p137
    %p139 = scmp.ne.s32.totalorder %s131, %s133
    %p140 = scmp.eq.s32.totalorder %s18, 1
    %p141 = por %p139, %p140
    %p142 = scmp.ne.s32.totalorder %s133, %s134
    %p143 = scmp.eq.s32.totalorder %s18, 0
    %p144 = por %p142, %p143
    %p145 = scmp.ne.s32.totalorder %s133, %s134
    %p146 = scmp.eq.s32.totalorder %s19, 1
    %p147 = por %p145, %p146
    %p149 = scmp.ne.s32.totalorder %s134, %s148
    %p150 = scmp.eq.s32.totalorder %s19, 0
    %p151 = por %p149, %p150
    %s153 = sadd.s32 %s152, 1
    %p156 = scmp.eq.s32.totalorder %s13, 1
    %p157 = scmp.ne.s32.totalorder %s152, %s154
    %p158 = scmp.eq.s32.totalorder %s13, 0
    %p159 = por %p157, %p158
    %p160 = scmp.ne.s32.totalorder %s152, %s154
    %p161 = scmp.eq.s32.totalorder %s18, 1
    %p162 = por %p160, %p161
    %p163 = scmp.ne.s32.totalorder %s154, %s155
    %p164 = scmp.eq.s32.totalorder %s18, 0
    %p165 = por %p163, %p164
    %p166 = scmp.ne.s32.totalorder %s154, %s155
    %p167 = scmp.eq.s32.totalorder %s19, 1
    %p168 = por %p166, %p167
    %p170 = scmp.ne.s32.totalorder %s155, %s169
    %p171 = scmp.eq.s32.totalorder %s19, 0
    %p172 = por %p170, %p171
    %s173 = ssub.s32 %s13, %s20
    %p174 = scmp.eq.s32.totalorder %s173, 0
    %s176 = sadd.s32 %s175, 1
    %s177 = scalar_select %p174, %s175, %s176
    %p180 = pneg %p174
    %p181 = scmp.eq.s32.totalorder %s13, 1
    %p182 = por %p180, %p181
    %p183 = scmp.ne.s32.totalorder %s175, %s178
    %p184 = scmp.eq.s32.totalorder %s13, 0
    %p185 = por %p183, %p184
    %p186 = scmp.ne.s32.totalorder %s175, %s178
    %p187 = scmp.eq.s32.totalorder %s18, 1
    %p188 = por %p186, %p187
    %p189 = scmp.ne.s32.totalorder %s178, %s179
    %p190 = scmp.eq.s32.totalorder %s18, 0
    %p191 = por %p189, %p190
    %p192 = scmp.ne.s32.totalorder %s178, %s179
    %p193 = scmp.eq.s32.totalorder %s19, 1
    %p194 = por %p192, %p193
    %p196 = scmp.ne.s32.totalorder %s179, %s195
    %p197 = scmp.eq.s32.totalorder %s19, 0
    %p198 = por %p196, %p197
    %p199 = scmp.le.s32.totalorder 1, %s13
    %p200 = scmp.lt.s32.totalorder %s13, 3
    %p201 = pnand %p199, %p200
    %p202 = pneg %p201
    // Predicated region
    $region9: #{mlp_forward.1} parent=5 // pred_check
      _
    $region10: #{mlp_forward.1} parent=5 // pred_check_branch
      %204 = sbr.rel (%p201) target = $region12
    $region11: #{mlp_forward.1} parent=5 // pred_region
      %s205 = ssub.s32 %s13, 1
      // Predicated region
      $region13: #{mlp_forward.1} parent=11 // pred_check
        %p206 = pneg %p60
      $region14: #{mlp_forward.1} parent=11 // pred_check_branch
        %208 = sbr.rel (%p206) target = $region16
      $region15: #{mlp_forward.1} parent=11 // pred_region
        _
      $region16: #{mlp_forward.1} parent=11 // pred_fallthru
        _
      // Predicated region
      $region17: #{mlp_forward.1} parent=11 // pred_check
        %p209 = pneg %p81
      $region18: #{mlp_forward.1} parent=11 // pred_check_branch
        %211 = sbr.rel (%p209) target = $region20
      $region19: #{mlp_forward.1} parent=11 // pred_region
        _
      $region20: #{mlp_forward.1} parent=11 // pred_fallthru
        _
      // Predicated region
      $region21: #{mlp_forward.1} parent=11 // pred_check
        %p212 = pneg %p102
      $region22: #{mlp_forward.1} parent=11 // pred_check_branch
        %214 = sbr.rel (%p212) target = $region24
      $region23: #{mlp_forward.1} parent=11 // pred_region
        _
      $region24: #{mlp_forward.1} parent=11 // pred_fallthru
        _
      // Predicated region
      $region25: #{mlp_forward.1} parent=11 // pred_check
        %p215 = pneg %p123
      $region26: #{mlp_forward.1} parent=11 // pred_check_branch
        %217 = sbr.rel (%p215) target = $region28
      $region27: #{mlp_forward.1} parent=11 // pred_region
        _
      $region28: #{mlp_forward.1} parent=11 // pred_fallthru
        _
      // Predicated region
      $region29: #{mlp_forward.1} parent=11 // pred_check
        %p218 = pneg %p144
      $region30: #{mlp_forward.1} parent=11 // pred_check_branch
        %220 = sbr.rel (%p218) target = $region32
      $region31: #{mlp_forward.1} parent=11 // pred_region
        _
      $region32: #{mlp_forward.1} parent=11 // pred_fallthru
        _
      // Predicated region
      $region33: #{mlp_forward.1} parent=11 // pred_check
        %p221 = pneg %p165
      $region34: #{mlp_forward.1} parent=11 // pred_check_branch
        %223 = sbr.rel (%p221) target = $region36
      $region35: #{mlp_forward.1} parent=11 // pred_region
        _
      $region36: #{mlp_forward.1} parent=11 // pred_fallthru
        _
    $region12: #{mlp_forward.1} parent=5 // pred_fallthru
      _
    %p224 = scmp.lt.s32.totalorder %s13, 2
    // Predicated region
    $region37: #{mlp_forward.1} parent=5 // pred_check
      %p225 = pneg %p224
    $region38: #{mlp_forward.1} parent=5 // pred_check_branch
      %227 = sbr.rel (%p225) target = $region40
    $region39: #{mlp_forward.1} parent=5 // pred_region
      // Predicated region
      $region41: #{mlp_forward.1} parent=39 // pred_check
        %p228 = pneg %p33
      $region42: #{mlp_forward.1} parent=39 // pred_check_branch
        %230 = sbr.rel (%p228) target = $region44
      $region43: #{mlp_forward.1} parent=39 // pred_region
        %s231 = smul.u32 16, %s13
        %p232 = scmp.lt.s32.totalorder %s231, 31
        %s233 = scalar_select %p232, %s231, 31
        %s234 = smul.addr %s233, 4
        %s235 = scalar_lea.vmem %s0, %s234
        %s236 = smul.u32 16, %s13
      $region44: #{mlp_forward.1} parent=39 // pred_fallthru
        _
    $region40: #{mlp_forward.1} parent=5 // pred_fallthru
      _
    %p237 = scmp.le.s32.totalorder 1, %s13
    %p238 = scmp.lt.s32.totalorder %s13, 3
    %p239 = pnand %p237, %p238
    %p240 = pneg %p239
    // Predicated region
    $region45: #{mlp_forward.1} parent=5 // pred_check
      _
    $region46: #{mlp_forward.1} parent=5 // pred_check_branch
      %242 = sbr.rel (%p239) target = $region48
    $region47: #{mlp_forward.1} parent=5 // pred_region
      %s243 = ssub.s32 %s13, 1
      %s244 = smul.u32 16, %s18
      %p245 = scmp.lt.s32.totalorder %s244, 31
      %s246 = scalar_select %p245, %s244, 31
      %s247 = smul.addr %s246, 4
      %s248 = scalar_lea.vmem %s0, %s247
      %p249 = pneg %p39
      %p250 = pneg %p36
      %p251 = pneg %p60
      %p252 = pneg %p57
      %p253 = pneg %p81
      %p254 = pneg %p78
      %p255 = pneg %p102
      %p256 = pneg %p99
      %p257 = pneg %p123
      %p258 = pneg %p120
      %p259 = pneg %p144
      %p260 = pneg %p141
      %p261 = pneg %p165
      %p262 = pneg %p162
      %p263 = pneg %p191
      %p264 = pneg %p188
      %s265 = smul.u32 16, %s18
      %p266 = scmp.lt.s32.totalorder %s265, 31
      %s267 = scalar_select %p266, %s265, 31
      %s268 = smul.addr %s267, 8
      %s269 = scalar_lea.vmem %s7, %s268
      %s270 = smul.u32 16, %s18
      %p271 = scmp.lt.s32.totalorder %s270, 31
      %s272 = scalar_select %p271, %s270, 31
      %s273 = smul.addr %s272, 4
      %s274 = scalar_lea.vmem %s0, %s273
      %s275 = smul.u32 16, %s18
      %s276 = smul.u32 16, %s18
      %p277 = scmp.lt.s32.totalorder %s276, 31
      %s278 = scalar_select %p277, %s276, 31
      %s279 = smul.addr %s278, 8
      %s280 = scalar_lea.vmem %s7, %s279
      %s281 = smul.u32 16, %s18
      %v282 = vld [vmem:[%s274] sm:$0xf]
      %v283 = vld [vmem:[%s274 + $0x4] sm:$0xf]
      %v284 = vld [vmem:[%s274 + $0x8] sm:$0xf]
      %v285 = vld [vmem:[%s274 + $0xc] sm:$0xf]
      %v286 = vld [vmem:[%s274 + $0x10] sm:$0xf]
      %v287 = vld [vmem:[%s274 + $0x14] sm:$0xf]
      %v288 = vld [vmem:[%s274 + $0x18] sm:$0xf]
      %v289 = vld [vmem:[%s274 + $0x1c] sm:$0xf]
      %v290 = vld [vmem:[%s274 + $0x20] sm:$0xf]
      %v291 = vld [vmem:[%s274 + $0x24] sm:$0xf]
      %v292 = vld [vmem:[%s274 + $0x28] sm:$0xf]
      %v293 = vld [vmem:[%s274 + $0x2c] sm:$0xf]
      %v294 = vld [vmem:[%s274 + $0x30] sm:$0xf]
      %v295 = vld [vmem:[%s274 + $0x34] sm:$0xf]
      %v296 = vld [vmem:[%s274 + $0x38] sm:$0xf]
      %v297 = vld [vmem:[%s274 + $0x3c] sm:$0xf]
      %v298 = vld [vmem:[%s1] sm:$0xf]
      %v299 = vld [vmem:[%s1 + $0x4] sm:$0xf]
      %v300 = vld [vmem:[%s1 + $0x8] sm:$0xf]
      %v301 = vld [vmem:[%s1 + $0xc] sm:$0xf]
      %v302 = vld [vmem:[%s1 + $0x10] sm:$0xf]
      %v303 = vld [vmem:[%s1 + $0x14] sm:$0xf]
      %v304 = vld [vmem:[%s1 + $0x18] sm:$0xf]
      %v305 = vld [vmem:[%s1 + $0x1c] sm:$0xf]
      %v306 = vld [vmem:[%s1 + $0x20] sm:$0xf]
      %v307 = vld [vmem:[%s1 + $0x24] sm:$0xf]
      %v308 = vld [vmem:[%s1 + $0x28] sm:$0xf]
      %v309 = vld [vmem:[%s1 + $0x2c] sm:$0xf]
      %v310 = vld [vmem:[%s1 + $0x30] sm:$0xf]
      %v311 = vld [vmem:[%s1 + $0x34] sm:$0xf]
      %v312 = vld [vmem:[%s1 + $0x38] sm:$0xf]
      %v313 = vld [vmem:[%s1 + $0x3c] sm:$0xf]
      %v314 = vld [vmem:[%s4] sm:$0x1]
      %v316 = vperm.slane %v314, 0
      %v334 = vunpack.c.l.b16 %v282
      %v335 = vunpack.c.l.b16 %v283
      %v336 = vunpack.c.l.b16 %v284
      %v337 = vunpack.c.l.b16 %v285
      %v338 = vunpack.c.l.b16 %v286
      %v339 = vunpack.c.l.b16 %v287
      %v340 = vunpack.c.l.b16 %v288
      %v341 = vunpack.c.l.b16 %v289
      %v342 = vunpack.c.l.b16 %v290
      %v343 = vunpack.c.l.b16 %v291
      %v344 = vunpack.c.l.b16 %v292
      %v345 = vunpack.c.l.b16 %v293
      %v346 = vunpack.c.l.b16 %v294
      %v347 = vunpack.c.l.b16 %v295
      %v348 = vunpack.c.l.b16 %v296
      %v349 = vunpack.c.l.b16 %v297
      %v350 = vpack.c.b16 %v335, %v334
      %v351 = vpack.c.b16 %v337, %v336
      %v352 = vpack.c.b16 %v339, %v338
      %v353 = vpack.c.b16 %v341, %v340
      %v354 = vpack.c.b16 %v343, %v342
      %v355 = vpack.c.b16 %v345, %v344
      %v356 = vpack.c.b16 %v347, %v346
      %v357 = vpack.c.b16 %v349, %v348
      %v382 = vunpack.c.l.b16 %v298
      %v383 = vunpack.c.l.b16 %v299
      %v384 = vunpack.c.l.b16 %v300
      %v385 = vunpack.c.l.b16 %v301
      %v386 = vunpack.c.l.b16 %v302
      %v387 = vunpack.c.l.b16 %v303
      %v388 = vunpack.c.l.b16 %v304
      %v389 = vunpack.c.l.b16 %v305
      %v390 = vunpack.c.l.b16 %v306
      %v391 = vunpack.c.l.b16 %v307
      %v392 = vunpack.c.l.b16 %v308
      %v393 = vunpack.c.l.b16 %v309
      %v394 = vunpack.c.l.b16 %v310
      %v395 = vunpack.c.l.b16 %v311
      %v396 = vunpack.c.l.b16 %v312
      %v397 = vunpack.c.l.b16 %v313
      %v398 = vpack.c.b16 %v383, %v382
      %v399 = vpack.c.b16 %v385, %v384
      %v400 = vpack.c.b16 %v387, %v386
      %v401 = vpack.c.b16 %v389, %v388
      %v402 = vpack.c.b16 %v391, %v390
      %v403 = vpack.c.b16 %v393, %v392
      %v404 = vpack.c.b16 %v395, %v394
      %v405 = vpack.c.b16 %v397, %v396
      %414 = vmatpush.bf16.msra.mxu0 %v405
      %415 = vmatpush.bf16.msra.mxu0 %v404
      %416 = vmatpush.bf16.msra.mxu0 %v403
      %417 = vmatpush.bf16.msra.mxu0 %v402
      %418 = vmatpush.bf16.msra.mxu0 %v401
      %419 = vmatpush.bf16.msra.mxu0 %v400
      %420 = vmatpush.bf16.msra.mxu0 %v399
      %421 = vmatpush.bf16.msra.mxu0 %v398
      %422 = vmatmul.bf16.gmra.mxu0 %v350
      %v423 = vpop.f32.mrf.mxu0
      %v424 = vadd.f32 %v316, %v423
      %v425 = vpop.f32.mrf.mxu0
      %v426 = vadd.f32 %v316, %v425
      %427 = vmatmul.bf16.gmra.mxu0 %v351
      %v428 = vpop.f32.mrf.mxu0
      %v429 = vadd.f32 %v316, %v428
      %v430 = vpop.f32.mrf.mxu0
      %v431 = vadd.f32 %v316, %v430
      %432 = vmatmul.bf16.gmra.mxu0 %v352
      %v433 = vpop.f32.mrf.mxu0
      %v434 = vadd.f32 %v316, %v433
      %v435 = vpop.f32.mrf.mxu0
      %v436 = vadd.f32 %v316, %v435
      %437 = vmatmul.bf16.gmra.mxu0 %v353
      %v438 = vpop.f32.mrf.mxu0
      %v439 = vadd.f32 %v316, %v438
      %v440 = vpop.f32.mrf.mxu0
      %v441 = vadd.f32 %v316, %v440
      %442 = vmatmul.bf16.gmra.mxu0 %v354
      %v443 = vpop.f32.mrf.mxu0
      %v444 = vadd.f32 %v316, %v443
      %v445 = vpop.f32.mrf.mxu0
      %v446 = vadd.f32 %v316, %v445
      %447 = vmatmul.bf16.gmra.mxu0 %v355
      %v448 = vpop.f32.mrf.mxu0
      %v449 = vadd.f32 %v316, %v448
      %v450 = vpop.f32.mrf.mxu0
      %v451 = vadd.f32 %v316, %v450
      %452 = vmatmul.bf16.gmra.mxu0 %v356
      %v453 = vpop.f32.mrf.mxu0
      %v454 = vadd.f32 %v316, %v453
      %v455 = vpop.f32.mrf.mxu0
      %v456 = vadd.f32 %v316, %v455
      %457 = vmatmul.bf16.gmra.mxu0 %v357
      %v458 = vpop.f32.mrf.mxu0
      %v459 = vadd.f32 %v316, %v458
      %v460 = vpop.f32.mrf.mxu0
      %v461 = vadd.f32 %v316, %v460
      %462 = vdwg.mxu0
      %v463 = vmax.f32 %v424, 0.0
      %v464 = vmax.f32 %v426, 0.0
      %v465 = vmax.f32 %v429, 0.0
      %v466 = vmax.f32 %v431, 0.0
      %v467 = vmax.f32 %v434, 0.0
      %v468 = vmax.f32 %v436, 0.0
      %v469 = vmax.f32 %v439, 0.0
      %v470 = vmax.f32 %v441, 0.0
      %v471 = vmax.f32 %v444, 0.0
      %v472 = vmax.f32 %v446, 0.0
      %v473 = vmax.f32 %v449, 0.0
      %v474 = vmax.f32 %v451, 0.0
      %v475 = vmax.f32 %v454, 0.0
      %v476 = vmax.f32 %v456, 0.0
      %v477 = vmax.f32 %v459, 0.0
      %v478 = vmax.f32 %v461, 0.0
      %v479 = vpack.c.bf16 %v464, %v463
      %v480 = vpack.c.bf16 %v466, %v465
      %v481 = vpack.c.bf16 %v468, %v467
      %v482 = vpack.c.bf16 %v470, %v469
      %v483 = vpack.c.bf16 %v472, %v471
      %v484 = vpack.c.bf16 %v474, %v473
      %v485 = vpack.c.bf16 %v476, %v475
      %v486 = vpack.c.bf16 %v478, %v477
      %v487 = vld [vmem:[%s2] sm:$0xf]
      %v488 = vld [vmem:[%s2 + $0x4] sm:$0xf]
      %v489 = vld [vmem:[%s2 + $0x8] sm:$0xf]
      %v490 = vld [vmem:[%s2 + $0xc] sm:$0xf]
      %v491 = vld [vmem:[%s2 + $0x10] sm:$0xf]
      %v492 = vld [vmem:[%s2 + $0x14] sm:$0xf]
      %v493 = vld [vmem:[%s2 + $0x18] sm:$0xf]
      %v494 = vld [vmem:[%s2 + $0x1c] sm:$0xf]
      %v495 = vld [vmem:[%s2 + $0x20] sm:$0xf]
      %v496 = vld [vmem:[%s2 + $0x24] sm:$0xf]
      %v497 = vld [vmem:[%s2 + $0x28] sm:$0xf]
      %v498 = vld [vmem:[%s2 + $0x2c] sm:$0xf]
      %v499 = vld [vmem:[%s2 + $0x30] sm:$0xf]
      %v500 = vld [vmem:[%s2 + $0x34] sm:$0xf]
      %v501 = vld [vmem:[%s2 + $0x38] sm:$0xf]
      %v502 = vld [vmem:[%s2 + $0x3c] sm:$0xf]
      %v503 = vld [vmem:[%s5] sm:$0x1]
      %v505 = vperm.slane %v503, 0
      %v523 = vunpack.c.l.b16 %v487
      %v524 = vunpack.c.l.b16 %v488
      %v525 = vunpack.c.l.b16 %v489
      %v526 = vunpack.c.l.b16 %v490
      %v527 = vunpack.c.l.b16 %v491
      %v528 = vunpack.c.l.b16 %v492
      %v529 = vunpack.c.l.b16 %v493
      %v530 = vunpack.c.l.b16 %v494
      %v531 = vunpack.c.l.b16 %v495
      %v532 = vunpack.c.l.b16 %v496
      %v533 = vunpack.c.l.b16 %v497
      %v534 = vunpack.c.l.b16 %v498
      %v535 = vunpack.c.l.b16 %v499
      %v536 = vunpack.c.l.b16 %v500
      %v537 = vunpack.c.l.b16 %v501
      %v538 = vunpack.c.l.b16 %v502
      %v539 = vpack.c.b16 %v524, %v523
      %v540 = vpack.c.b16 %v526, %v525
      %v541 = vpack.c.b16 %v528, %v527
      %v542 = vpack.c.b16 %v530, %v529
      %v543 = vpack.c.b16 %v532, %v531
      %v544 = vpack.c.b16 %v534, %v533
      %v545 = vpack.c.b16 %v536, %v535
      %v546 = vpack.c.b16 %v538, %v537
      %555 = vmatpush.bf16.msra.mxu0 %v546
      %556 = vmatpush.bf16.msra.mxu0 %v545
      %557 = vmatpush.bf16.msra.mxu0 %v544
      %558 = vmatpush.bf16.msra.mxu0 %v543
      %559 = vmatpush.bf16.msra.mxu0 %v542
      %560 = vmatpush.bf16.msra.mxu0 %v541
      %561 = vmatpush.bf16.msra.mxu0 %v540
      %562 = vmatpush.bf16.msra.mxu0 %v539
      %563 = vmatmul.bf16.gmra.mxu0 %v479
      %v564 = vpop.f32.mrf.mxu0
      %v565 = vadd.f32 %v505, %v564
      %v566 = vpop.f32.mrf.mxu0
      %v567 = vadd.f32 %v505, %v566
      %568 = vmatmul.bf16.gmra.mxu0 %v480
      %v569 = vpop.f32.mrf.mxu0
      %v570 = vadd.f32 %v505, %v569
      %v571 = vpop.f32.mrf.mxu0
      %v572 = vadd.f32 %v505, %v571
      %573 = vmatmul.bf16.gmra.mxu0 %v481
      %v574 = vpop.f32.mrf.mxu0
      %v575 = vadd.f32 %v505, %v574
      %v576 = vpop.f32.mrf.mxu0
      %v577 = vadd.f32 %v505, %v576
      %578 = vmatmul.bf16.gmra.mxu0 %v482
      %v579 = vpop.f32.mrf.mxu0
      %v580 = vadd.f32 %v505, %v579
      %v581 = vpop.f32.mrf.mxu0
      %v582 = vadd.f32 %v505, %v581
      %583 = vmatmul.bf16.gmra.mxu0 %v483
      %v584 = vpop.f32.mrf.mxu0
      %v585 = vadd.f32 %v505, %v584
      %v586 = vpop.f32.mrf.mxu0
      %v587 = vadd.f32 %v505, %v586
      %588 = vmatmul.bf16.gmra.mxu0 %v484
      %v589 = vpop.f32.mrf.mxu0
      %v590 = vadd.f32 %v505, %v589
      %v591 = vpop.f32.mrf.mxu0
      %v592 = vadd.f32 %v505, %v591
      %593 = vmatmul.bf16.gmra.mxu0 %v485
      %v594 = vpop.f32.mrf.mxu0
      %v595 = vadd.f32 %v505, %v594
      %v596 = vpop.f32.mrf.mxu0
      %v597 = vadd.f32 %v505, %v596
      %598 = vmatmul.bf16.gmra.mxu0 %v486
      %v599 = vpop.f32.mrf.mxu0
      %v600 = vadd.f32 %v505, %v599
      %v601 = vpop.f32.mrf.mxu0
      %v602 = vadd.f32 %v505, %v601
      %603 = vdwg.mxu0
      %v604 = vmax.f32 %v565, 0.0
      %v605 = vmax.f32 %v567, 0.0
      %v606 = vmax.f32 %v570, 0.0
      %v607 = vmax.f32 %v572, 0.0
      %v608 = vmax.f32 %v575, 0.0
      %v609 = vmax.f32 %v577, 0.0
      %v610 = vmax.f32 %v580, 0.0
      %v611 = vmax.f32 %v582, 0.0
      %v612 = vmax.f32 %v585, 0.0
      %v613 = vmax.f32 %v587, 0.0
      %v614 = vmax.f32 %v590, 0.0
      %v615 = vmax.f32 %v592, 0.0
      %v616 = vmax.f32 %v595, 0.0
      %v617 = vmax.f32 %v597, 0.0
      %v618 = vmax.f32 %v600, 0.0
      %v619 = vmax.f32 %v602, 0.0
      %v620 = vpack.c.bf16 %v605, %v604
      %v621 = vpack.c.bf16 %v607, %v606
      %v622 = vpack.c.bf16 %v609, %v608
      %v623 = vpack.c.bf16 %v611, %v610
      %v624 = vpack.c.bf16 %v613, %v612
      %v625 = vpack.c.bf16 %v615, %v614
      %v626 = vpack.c.bf16 %v617, %v616
      %v627 = vpack.c.bf16 %v619, %v618
      %v628 = vld [vmem:[%s3] sm:$0xf]
      %v629 = vld [vmem:[%s3 + $0x4] sm:$0xf]
      %v630 = vld [vmem:[%s3 + $0x8] sm:$0xf]
      %v631 = vld [vmem:[%s3 + $0xc] sm:$0xf]
      %v632 = vld [vmem:[%s3 + $0x10] sm:$0xf]
      %v633 = vld [vmem:[%s3 + $0x14] sm:$0xf]
      %v634 = vld [vmem:[%s3 + $0x18] sm:$0xf]
      %v635 = vld [vmem:[%s3 + $0x1c] sm:$0xf]
      %v636 = vld [vmem:[%s3 + $0x20] sm:$0xf]
      %v637 = vld [vmem:[%s3 + $0x24] sm:$0xf]
      %v638 = vld [vmem:[%s3 + $0x28] sm:$0xf]
      %v639 = vld [vmem:[%s3 + $0x2c] sm:$0xf]
      %v640 = vld [vmem:[%s3 + $0x30] sm:$0xf]
      %v641 = vld [vmem:[%s3 + $0x34] sm:$0xf]
      %v642 = vld [vmem:[%s3 + $0x38] sm:$0xf]
      %v643 = vld [vmem:[%s3 + $0x3c] sm:$0xf]
      %v644 = vld [vmem:[%s6] sm:$0x1]
      %v646 = vperm.slane %v644, 0
      %v664 = vunpack.c.l.b16 %v628
      %v665 = vunpack.c.l.b16 %v629
      %v666 = vunpack.c.l.b16 %v630
      %v667 = vunpack.c.l.b16 %v631
      %v668 = vunpack.c.l.b16 %v632
      %v669 = vunpack.c.l.b16 %v633
      %v670 = vunpack.c.l.b16 %v634
      %v671 = vunpack.c.l.b16 %v635
      %v672 = vunpack.c.l.b16 %v636
      %v673 = vunpack.c.l.b16 %v637
      %v674 = vunpack.c.l.b16 %v638
      %v675 = vunpack.c.l.b16 %v639
      %v676 = vunpack.c.l.b16 %v640
      %v677 = vunpack.c.l.b16 %v641
      %v678 = vunpack.c.l.b16 %v642
      %v679 = vunpack.c.l.b16 %v643
      %v680 = vpack.c.b16 %v665, %v664
      %v681 = vpack.c.b16 %v667, %v666
      %v682 = vpack.c.b16 %v669, %v668
      %v683 = vpack.c.b16 %v671, %v670
      %v684 = vpack.c.b16 %v673, %v672
      %v685 = vpack.c.b16 %v675, %v674
      %v686 = vpack.c.b16 %v677, %v676
      %v687 = vpack.c.b16 %v679, %v678
      %696 = vmatpush.bf16.msra.mxu0 %v687
      %697 = vmatpush.bf16.msra.mxu0 %v686
      %698 = vmatpush.bf16.msra.mxu0 %v685
      %699 = vmatpush.bf16.msra.mxu0 %v684
      %700 = vmatpush.bf16.msra.mxu0 %v683
      %701 = vmatpush.bf16.msra.mxu0 %v682
      %702 = vmatpush.bf16.msra.mxu0 %v681
      %703 = vmatpush.bf16.msra.mxu0 %v680
      %704 = vmatmul.bf16.gmra.mxu0 %v620
      %v705 = vpop.f32.mrf.mxu0
      %v706 = vadd.f32 %v646, %v705
      %v707 = vpop.f32.mrf.mxu0
      %v708 = vadd.f32 %v646, %v707
      %709 = vmatmul.bf16.gmra.mxu0 %v621
      %v710 = vpop.f32.mrf.mxu0
      %v711 = vadd.f32 %v646, %v710
      %v712 = vpop.f32.mrf.mxu0
      %v713 = vadd.f32 %v646, %v712
      %714 = vmatmul.bf16.gmra.mxu0 %v622
      %v715 = vpop.f32.mrf.mxu0
      %v716 = vadd.f32 %v646, %v715
      %v717 = vpop.f32.mrf.mxu0
      %v718 = vadd.f32 %v646, %v717
      %719 = vmatmul.bf16.gmra.mxu0 %v623
      %v720 = vpop.f32.mrf.mxu0
      %v721 = vadd.f32 %v646, %v720
      %v722 = vpop.f32.mrf.mxu0
      %v723 = vadd.f32 %v646, %v722
      %724 = vmatmul.bf16.gmra.mxu0 %v624
      %v725 = vpop.f32.mrf.mxu0
      %v726 = vadd.f32 %v646, %v725
      %v727 = vpop.f32.mrf.mxu0
      %v728 = vadd.f32 %v646, %v727
      %729 = vmatmul.bf16.gmra.mxu0 %v625
      %v730 = vpop.f32.mrf.mxu0
      %v731 = vadd.f32 %v646, %v730
      %v732 = vpop.f32.mrf.mxu0
      %v733 = vadd.f32 %v646, %v732
      %734 = vmatmul.bf16.gmra.mxu0 %v626
      %v735 = vpop.f32.mrf.mxu0
      %v736 = vadd.f32 %v646, %v735
      %v737 = vpop.f32.mrf.mxu0
      %v738 = vadd.f32 %v646, %v737
      %739 = vmatmul.bf16.gmra.mxu0 %v627
      %v740 = vpop.f32.mrf.mxu0
      %v741 = vadd.f32 %v646, %v740
      %v742 = vpop.f32.mrf.mxu0
      %v743 = vadd.f32 %v646, %v742
      %744 = vdwg.mxu0
      %745 = vst [vmem:[%s280] sm:$0xff] %v706
      %746 = vst [vmem:[%s280 + $0x8] sm:$0xff] %v708
      %747 = vst [vmem:[%s280 + $0x10] sm:$0xff] %v711
      %748 = vst [vmem:[%s280 + $0x18] sm:$0xff] %v713
      %749 = vst [vmem:[%s280 + $0x20] sm:$0xff] %v716
      %750 = vst [vmem:[%s280 + $0x28] sm:$0xff] %v718
      %751 = vst [vmem:[%s280 + $0x30] sm:$0xff] %v721
      %752 = vst [vmem:[%s280 + $0x38] sm:$0xff] %v723
      %753 = vst [vmem:[%s280 + $0x40] sm:$0xff] %v726
      %754 = vst [vmem:[%s280 + $0x48] sm:$0xff] %v728
      %755 = vst [vmem:[%s280 + $0x50] sm:$0xff] %v731
      %756 = vst [vmem:[%s280 + $0x58] sm:$0xff] %v733
      %757 = vst [vmem:[%s280 + $0x60] sm:$0xff] %v736
      %758 = vst [vmem:[%s280 + $0x68] sm:$0xff] %v738
      %759 = vst [vmem:[%s280 + $0x70] sm:$0xff] %v741
      %760 = vst [vmem:[%s280 + $0x78] sm:$0xff] %v743
      %s761 = smul.u32 16, %s18
      %p762 = scmp.lt.s32.totalorder %s761, 31
      %s763 = scalar_select %p762, %s761, 31
      %s764 = smul.addr %s763, 8
      %s765 = scalar_lea.vmem %s7, %s764
      // Predicated region
      $region49: #{mlp_forward.1} parent=47 // pred_check
        %p766 = pneg %p188
      $region50: #{mlp_forward.1} parent=47 // pred_check_branch
        %768 = sbr.rel (%p766) target = $region52
      $region51: #{mlp_forward.1} parent=47 // pred_region
        %s769 = smul.u32 16, %s18
      $region52: #{mlp_forward.1} parent=47 // pred_fallthru
        _
    $region48: #{mlp_forward.1} parent=5 // pred_fallthru
      _
    %p770 = scmp.le.s32.totalorder 2, %s13
    // Predicated region
    $region53: #{mlp_forward.1} parent=5 // pred_check
      %p771 = pneg %p770
    $region54: #{mlp_forward.1} parent=5 // pred_check_branch
      %773 = sbr.rel (%p771) target = $region56
    $region55: #{mlp_forward.1} parent=5 // pred_region
      %s774 = ssub.s32 %s13, 2
      // Predicated region
      $region57: #{mlp_forward.1} parent=55 // pred_check
        %p775 = pneg %p194
      $region58: #{mlp_forward.1} parent=55 // pred_check_branch
        %777 = sbr.rel (%p775) target = $region60
      $region59: #{mlp_forward.1} parent=55 // pred_region
        %s778 = smul.u32 16, %s19
        %p779 = scmp.lt.s32.totalorder %s778, 31
        %s780 = scalar_select %p779, %s778, 31
        %s781 = smul.addr %s780, 8
        %s782 = scalar_lea.vmem %s7, %s781
      $region60: #{mlp_forward.1} parent=55 // pred_fallthru
        _
    $region56: #{mlp_forward.1} parent=5 // pred_fallthru
      _
  $region6: #{mlp_forward.1} parent=0 // loop_footer
    %s17 = sadd.s32 1, %s13
  $region7: #{mlp_forward.1} parent=0 // loop_footer_branch
    %12 = sbr.rel target = $region3
  $region8: #{mlp_forward.1} parent=0 // loop_exit
    _

</llo_original>
